<compile_context>
chip_gen: v7x
topology: tpu7x:2x2x1
jax: 0.10.0
libtpu: 0.0.40
codegen_flags: <defaults>
</compile_context>

<pallas_src>
import functools
import math

import jax
import jax.numpy as jnp
from jax.experimental import pallas as pl
from jax.experimental.pallas import tpu as pltpu

GEM_EPS = 1e-6
BN_EPS = 1e-5


def _round_up(x, m):
    return ((x + m - 1) // m) * m


def _vmem_capacity_bytes():
    """Per-core VMEM capacity; conservative (v7x) fallback if the query is unavailable."""
    try:
        info = pltpu.get_tpu_info()
        cap = getattr(info, "vmem_capacity_bytes", None)
        if cap:
            return int(cap)
    except Exception:
        pass
    return 64 * 1024 * 1024


def _pick_batch_tile(B, T, C, in_itemsize, Hp, NCp, budget_bytes):
    """Largest batch tile whose working set fits the VMEM budget.

    Accounts for the lane/sublane padding of the [TB, T, C] feature block, the double
    buffering of inputs/outputs, and ~3 live f32 temporaries of the feature block inside
    the kernel (x, xc, xp).  Keeps >= 2 grid steps for large batches so the "parallel"
    grid axis can be split across v7x's two TensorCores.
    """
    Cp = _round_up(C, 128)   # lane padding of the feature block (C=32 -> 4x padded)
    Tp = _round_up(T, 8)     # sublane padding
    per_row = (2 * Tp * Cp * in_itemsize        # double-buffered input block
               + 3 * Tp * Cp * 4                # live f32 temporaries in the kernel
               + 2 * (Hp + NCp) * 4)            # double-buffered output rows
    tb = max(8, (budget_bytes // max(per_row, 1)) // 8 * 8)
    if B >= 16:
        # >= 2 grid steps so dimension_semantics=("parallel",) can shard across
        # v7x's 2 TensorCores (harmless on single-TC v5e/v6e).
        tb = min(tb, _round_up(-(-B // 2), 8))
    if tb >= B:
        return B  # whole batch in one block (block dim == full dim is always legal)
    return tb     # multiple of 8; a non-divisible B uses a partial (masked) last tile


def _gem_head_kernel(*refs, n_patches, static_p, bf16_transcendentals):
    if static_p is None:
        (p_ref, feat_ref, w1_ref, b1_ref, w2_ref, b2_ref, cls_ref, f_ref) = refs
    else:
        (feat_ref, w1_ref, b1_ref, w2_ref, b2_ref, cls_ref, f_ref) = refs

    x = feat_ref[...].astype(jnp.float32)            # [TB, T, C]
    xc = jnp.maximum(x, GEM_EPS)                     # clamp(min=eps)

    # ---- x^p ---------------------------------------------------------------------
    if static_p is not None and float(static_p) == float(int(static_p)) and int(static_p) >= 1:
        k = int(static_p)
        xp = xc
        for _ in range(k - 1):                       # VPU multiplies; EUP slot stays free
            xp = xp * xc
        inv_p = jnp.float32(1.0 / float(static_p))
    elif static_p is not None:
        ps = jnp.float32(static_p)
        xp = jnp.exp(ps * jnp.log(xc))
        inv_p = jnp.float32(1.0 / float(static_p))
    else:
        p = p_ref[0]                                 # learned GeM exponent (SMEM scalar)
        if bf16_transcendentals:
            # v6e/v7x have a bf16 EUP: do the per-element log/exp in bf16 (half the EUP
            # cycles), accumulate the token sum in f32.  Do NOT use on v5e (no bf16 EUP).
            xb = xc.astype(jnp.bfloat16)
            xp = jnp.exp(jnp.log(xb) * p.astype(jnp.bfloat16)).astype(jnp.float32)
        else:
            xp = jnp.exp(p * jnp.log(xc))
        inv_p = 1.0 / p

    # ---- drop the CLS token: full token sum minus the single CLS row ---------------
    # (cheap [TB, C] subtract; no iota/select over the [TB, T, C] tensor, no relayout)
    s = jnp.sum(xp, axis=1) - xp[:, 0, :]            # [TB, C]  sum over the N patch tokens
    s = jnp.maximum(s, jnp.float32(1e-30))           # guard the degenerate-cancellation case
    # (s / N)^(1/p) == exp((log s - log N) * (1/p))  (mean's divide folded into the log)
    g = jnp.exp((jnp.log(s) - jnp.float32(math.log(n_patches))) * inv_p)

    # ---- ClassBlock (BN already folded into w1/b1 in the wrapper) ------------------
    feat = jnp.dot(g, w1_ref[...], preferred_element_type=jnp.float32) + b1_ref[...]   # [TB, Hp]
    # TODO(synk): Dropout(droprate) is identity at inference; not modeled here.
    cls = jnp.dot(feat, w2_ref[...], preferred_element_type=jnp.float32) + b2_ref[...]  # [TB, NCp]

    f_ref[...] = feat.astype(f_ref.dtype)
    cls_ref[...] = cls.astype(cls_ref.dtype)


def gem_head(features, p, w1, b1, rm, rv, gamma, beta, w2, b2, *,
             static_p=None, bf16_transcendentals=False):
    """GeM pooling over patch tokens + ClassBlock. Returns (cls_logits, bottleneck_feature)."""
    B, T, C = features.shape
    n_patches = T - 1
    H = w1.shape[1]
    NC = w2.shape[1]
    Hp = _round_up(H, 128)    # lane-dense bottleneck width
    NCp = _round_up(NC, 128)  # lane-dense logits width

    # Guard the static-p fast path against a mismatched learned parameter.
    if static_p is not None:
        p_concrete = None
        try:
            p_concrete = float(jnp.asarray(p).reshape(-1)[0])
        except Exception:
            p_concrete = None  # traced p: cannot verify at trace time
        if p_concrete is not None and abs(p_concrete - float(static_p)) > 1e-5:
            raise ValueError(
                f"static_p={static_p} does not match the learned GeM exponent p={p_concrete}")

    # Fold eval-mode BatchNorm1d into the first Linear (once, on tiny [C,H] tensors).
    scale = gamma.astype(jnp.float32) * jax.lax.rsqrt(rv.astype(jnp.float32) + BN_EPS)
    w1f = w1.astype(jnp.float32) * scale[None, :]
    b1f = (b1.astype(jnp.float32) - rm.astype(jnp.float32)) * scale + beta.astype(jnp.float32)

    # Pad weights/biases so both matmul outputs (and both stores) are lane-dense.
    w1p = jnp.zeros((C, Hp), jnp.float32).at[:, :H].set(w1f)
    b1p = jnp.zeros((1, Hp), jnp.float32).at[0, :H].set(b1f)
    w2p = jnp.zeros((Hp, NCp), jnp.float32).at[:H, :NC].set(w2.astype(jnp.float32))
    b2p = jnp.zeros((1, NCp), jnp.float32).at[0, :NC].set(b2.astype(jnp.float32))

    # VMEM budgeting from the actual chip (64 MiB/TC v7x, 128 MiB v5e/v6e), with headroom.
    vmem_cap = _vmem_capacity_bytes()
    vmem_limit = min((vmem_cap * 3) // 4, 96 * 1024 * 1024)   # 48 MiB on v7x, 96 MiB on v5e/v6e
    TB = _pick_batch_tile(B, T, C, features.dtype.itemsize, Hp, NCp,
                          budget_bytes=vmem_limit // 2)
    grid = (pl.cdiv(B, TB),)   # non-divisible B -> partial (masked) last tile

    kernel = functools.partial(_gem_head_kernel, n_patches=n_patches, static_p=static_p,
                               bf16_transcendentals=bf16_transcendentals)

    in_specs = []
    args = []
    if static_p is None:
        in_specs.append(pl.BlockSpec(memory_space=pltpu.MemorySpace.SMEM))
        args.append(jnp.asarray(p, jnp.float32).reshape((1,)))
    in_specs += [
        pl.BlockSpec((TB, T, C), lambda i: (i, 0, 0)),    # features tile (auto double-buffered)
        pl.BlockSpec((C, Hp), lambda i: (0, 0)),          # folded Linear-1 weight
        pl.BlockSpec((1, Hp), lambda i: (0, 0)),          # folded Linear-1 bias
        pl.BlockSpec((Hp, NCp), lambda i: (0, 0)),        # Linear-2 weight
        pl.BlockSpec((1, NCp), lambda i: (0, 0)),         # Linear-2 bias
    ]
    args += [features, w1p, b1p, w2p, b2p]

    cls_pad, feat_pad = pl.pallas_call(
        kernel,
        grid=grid,
        in_specs=in_specs,
        out_specs=(
            pl.BlockSpec((TB, NCp), lambda i: (i, 0)),
            pl.BlockSpec((TB, Hp), lambda i: (i, 0)),
        ),
        out_shape=(
            jax.ShapeDtypeStruct((B, NCp), jnp.float32),   # padded cls logits
            jax.ShapeDtypeStruct((B, Hp), jnp.float32),    # padded bottleneck feature
        ),
        compiler_params=pltpu.CompilerParams(
            dimension_semantics=("parallel",),
            vmem_limit_bytes=vmem_limit,
        ),
    )(*args)

    return cls_pad[:, :NC], feat_pad[:, :H]


def reference(features, p, w1, b1, rm, rv, gamma, beta, w2, b2):
    """Pure-JAX reference mirroring the PyTorch forward."""
    x = features[:, 1:, :].astype(jnp.float32)                       # [B, N, C]
    x = jnp.transpose(x, (0, 2, 1))                                  # [B, C, N]  (transpose(1,2))
    pooled = jnp.mean(jnp.maximum(x, GEM_EPS) ** p, axis=-1)         # GeM avg-pool over patches
    g = pooled ** (1.0 / p)                                          # [B, C]
    h = g @ w1 + b1
    feat = (h - rm) / jnp.sqrt(rv + BN_EPS) * gamma + beta
    cls = feat @ w2 + b2
    return cls, feat


if __name__ == "__main__":
    # opt.in_planes = 32, opt.nclasses = 8, opt.num_bottleneck = 16,
    # opt.h = opt.w = 64  ->  N_patches = (64//16)*(64//16) = 16, T = 17 tokens.
    B, N, C = 2, 16, 32
    H, NCLS = 16, 8
    T = N + 1

    key = jax.random.PRNGKey(0)
    ks = jax.random.split(key, 10)

    # |features|+0.1 so GeM's clamp(min=eps) path is well-exercised but smooth.
    features = jnp.abs(jax.random.normal(ks[0], (B, T, C), dtype=jnp.float32)) + 0.1

    p = jnp.array([3.0], dtype=jnp.float32)                                   # GeM exponent
    w1 = jax.random.normal(ks[1], (C, H), dtype=jnp.float32) * 0.05           # Linear(in_planes, num_bottleneck)
    b1 = jax.random.normal(ks[2], (H,), dtype=jnp.float32) * 0.01
    rm = jax.random.normal(ks[3], (H,), dtype=jnp.float32) * 0.1              # BN running_mean
    rv = jnp.abs(jax.random.normal(ks[4], (H,), dtype=jnp.float32)) * 0.5 + 0.5  # BN running_var
    gamma = jax.random.normal(ks[5], (H,), dtype=jnp.float32) * 0.1 + 1.0     # BN weight
    beta = jax.random.normal(ks[6], (H,), dtype=jnp.float32) * 0.1            # BN bias
    w2 = jax.random.normal(ks[7], (H, NCLS), dtype=jnp.float32) * 0.05        # Linear(num_bottleneck, nclasses)
    b2 = jax.random.normal(ks[8], (NCLS,), dtype=jnp.float32) * 0.01

    cls_ref_v, feat_ref_v = reference(features, p[0], w1, b1, rm, rv, gamma, beta, w2, b2)

    # General learned-p path (exp/log on EUP in f32, p read from SMEM).
    cls_out, feat_out = gem_head(features, p, w1, b1, rm, rv, gamma, beta, w2, b2)
    jax.block_until_ready((cls_out, feat_out))
    assert cls_out.shape == (B, NCLS) and feat_out.shape == (B, H)
    assert jnp.allclose(cls_out, cls_ref_v, atol=1e-4, rtol=1e-4)
    assert jnp.allclose(feat_out, feat_ref_v, atol=1e-4, rtol=1e-4)

    # Static integer-p fast path (pure VPU multiplies, no transcendentals for x^p).
    cls_fast, feat_fast = gem_head(features, p, w1, b1, rm, rv, gamma, beta, w2, b2, static_p=3)
    jax.block_until_ready((cls_fast, feat_fast))
    assert jnp.allclose(cls_fast, cls_ref_v, atol=1e-4, rtol=1e-4)
    assert jnp.allclose(feat_fast, feat_ref_v, atol=1e-4, rtol=1e-4)

    # Learned-p path with bf16 transcendentals (v6e/v7x bf16 EUP); looser tolerance.
    cls_bf, feat_bf = gem_head(features, p, w1, b1, rm, rv, gamma, beta, w2, b2,
                               bf16_transcendentals=True)
    jax.block_until_ready((cls_bf, feat_bf))
    assert jnp.allclose(cls_bf, cls_ref_v, atol=5e-2, rtol=5e-2)
    assert jnp.allclose(feat_bf, feat_ref_v, atol=5e-2, rtol=5e-2)

    # Larger batch exercising the multi-step grid (>=2 tiles) and the partial last tile.
    B2 = 20
    features2 = jnp.abs(jax.random.normal(ks[9], (B2, T, C), dtype=jnp.float32)) + 0.1
    cls_ref2, feat_ref2 = reference(features2, p[0], w1, b1, rm, rv, gamma, beta, w2, b2)
    cls2, feat2 = gem_head(features2, p, w1, b1, rm, rv, gamma, beta, w2, b2, static_p=3)
    jax.block_until_ready((cls2, feat2))
    assert cls2.shape == (B2, NCLS) and feat2.shape == (B2, H)
    assert jnp.allclose(cls2, cls_ref2, atol=1e-4, rtol=1e-4)
    assert jnp.allclose(feat2, feat_ref2, atol=1e-4, rtol=1e-4)

    print("KERNEL_OK")
</pallas_src>

<mosaic_0001>
module attributes {stable_mosaic.version = 11 : i64} {
  func.func @_gem_head_kernel(%arg0: i32, %arg1: memref<1xf32, #tpu.memory_space<smem>>, %arg2: memref<2x17x32xf32, #tpu.memory_space<vmem>>, %arg3: memref<32x128xf32, #tpu.memory_space<vmem>>, %arg4: memref<1x128xf32, #tpu.memory_space<vmem>>, %arg5: memref<128x128xf32, #tpu.memory_space<vmem>>, %arg6: memref<1x128xf32, #tpu.memory_space<vmem>>, %arg7: memref<2x128xf32, #tpu.memory_space<vmem>>, %arg8: memref<2x128xf32, #tpu.memory_space<vmem>>) attributes {dimension_semantics = [#tpu.dimension_semantics<parallel>], iteration_bounds = array<i64: 1>, scalar_prefetch = 0 : i64, scratch_operands = 0 : i64, tpu.core_type = #tpu.core_type<tc>, window_params = [{transform_indices = @transform_0, window_bounds = array<i64: 1>}, {transform_indices = @transform_1, window_bounds = array<i64: 2, 17, 32>}, {pipeline_mode = #tpu.pipeline_mode<synchronous>, transform_indices = @transform_2, window_bounds = array<i64: 32, 128>}, {pipeline_mode = #tpu.pipeline_mode<synchronous>, transform_indices = @transform_3, window_bounds = array<i64: 1, 128>}, {pipeline_mode = #tpu.pipeline_mode<synchronous>, transform_indices = @transform_4, window_bounds = array<i64: 128, 128>}, {pipeline_mode = #tpu.pipeline_mode<synchronous>, transform_indices = @transform_5, window_bounds = array<i64: 1, 128>}, {transform_indices = @transform_6, window_bounds = array<i64: 2, 128>}, {transform_indices = @transform_7, window_bounds = array<i64: 2, 128>}]} {
    %c0 = arith.constant 0 : index
    %c0_0 = arith.constant 0 : index
    %c0_1 = arith.constant 0 : index
    %0 = vector.load %arg2[%c0, %c0_0, %c0_1] : memref<2x17x32xf32, #tpu.memory_space<vmem>>, vector<2x17x32xf32>
    %cst = arith.constant 9.99999997E-7 : f32
    %1 = vector.broadcast %cst : f32 to vector<2x17x32xf32>
    %2 = arith.maximumf %0, %1 : vector<2x17x32xf32>
    %c0_2 = arith.constant 0 : index
    %3 = memref.load %arg1[%c0_2] : memref<1xf32, #tpu.memory_space<smem>>
    %4 = math.log %2 : vector<2x17x32xf32>
    %5 = vector.broadcast %3 : f32 to vector<2x17x32xf32>
    %6 = arith.mulf %5, %4 : vector<2x17x32xf32>
    %7 = math.exp %6 : vector<2x17x32xf32>
    %cst_3 = arith.constant 1.000000e+00 : f32
    %8 = arith.divf %cst_3, %3 : f32
    %cst_4 = arith.constant dense<0.000000e+00> : vector<2x32xf32>
    %9 = vector.multi_reduction <add>, %7, %cst_4 [1] : vector<2x17x32xf32> to vector<2x32xf32>
    %10 = vector.extract_strided_slice %7 {offsets = [0, 0, 0], sizes = [2, 1, 32], strides = [1, 1, 1]} : vector<2x17x32xf32> to vector<2x1x32xf32>
    %11 = vector.shape_cast %10 : vector<2x1x32xf32> to vector<2x32xf32>
    %12 = arith.subf %9, %11 : vector<2x32xf32>
    %cst_5 = arith.constant 1.000000e-30 : f32
    %13 = vector.broadcast %cst_5 : f32 to vector<2x32xf32>
    %14 = arith.maximumf %12, %13 : vector<2x32xf32>
    %15 = math.log %14 : vector<2x32xf32>
    %cst_6 = arith.constant 2.77258873 : f32
    %16 = vector.broadcast %cst_6 : f32 to vector<2x32xf32>
    %17 = arith.subf %15, %16 : vector<2x32xf32>
    %18 = vector.broadcast %8 : f32 to vector<2x32xf32>
    %19 = arith.mulf %17, %18 : vector<2x32xf32>
    %20 = math.exp %19 : vector<2x32xf32>
    %c0_7 = arith.constant 0 : index
    %c0_8 = arith.constant 0 : index
    %21 = vector.load %arg3[%c0_7, %c0_8] : memref<32x128xf32, #tpu.memory_space<vmem>>, vector<32x128xf32>
    %cst_9 = arith.constant dense<0.000000e+00> : vector<2x128xf32>
    %22 = tpu.matmul %20, %21, %cst_9 {dimension_numbers = #tpu.dot_dimension_numbers<[1], [0], [0], [1], [0, 0, 1, 1], [], []>} : vector<2x32xf32>, vector<32x128xf32>, vector<2x128xf32> -> vector<2x128xf32>
    %c0_10 = arith.constant 0 : index
    %c0_11 = arith.constant 0 : index
    %23 = vector.load %arg4[%c0_10, %c0_11] : memref<1x128xf32, #tpu.memory_space<vmem>>, vector<1x128xf32>
    %24 = vector.broadcast %23 : vector<1x128xf32> to vector<2x128xf32>
    %25 = arith.addf %22, %24 : vector<2x128xf32>
    %c0_12 = arith.constant 0 : index
    %c0_13 = arith.constant 0 : index
    %26 = vector.load %arg5[%c0_12, %c0_13] : memref<128x128xf32, #tpu.memory_space<vmem>>, vector<128x128xf32>
    %cst_14 = arith.constant dense<0.000000e+00> : vector<2x128xf32>
    %27 = tpu.matmul %25, %26, %cst_14 {dimension_numbers = #tpu.dot_dimension_numbers<[1], [0], [0], [1], [0, 0, 1, 1], [], []>} : vector<2x128xf32>, vector<128x128xf32>, vector<2x128xf32> -> vector<2x128xf32>
    %c0_15 = arith.constant 0 : index
    %c0_16 = arith.constant 0 : index
    %28 = vector.load %arg6[%c0_15, %c0_16] : memref<1x128xf32, #tpu.memory_space<vmem>>, vector<1x128xf32>
    %29 = vector.broadcast %28 : vector<1x128xf32> to vector<2x128xf32>
    %30 = arith.addf %27, %29 : vector<2x128xf32>
    %c0_17 = arith.constant 0 : index
    %c0_18 = arith.constant 0 : index
    %31 = vector.load %arg8[%c0_17, %c0_18] : memref<2x128xf32, #tpu.memory_space<vmem>>, vector<2x128xf32>
    tpu.vector_store %arg8[%c0_17, %c0_18], %25 {strides = array<i32>} : memref<2x128xf32, #tpu.memory_space<vmem>>, vector<2x128xf32>,
    %c0_19 = arith.constant 0 : index
    %c0_20 = arith.constant 0 : index
    %32 = vector.load %arg7[%c0_19, %c0_20] : memref<2x128xf32, #tpu.memory_space<vmem>>, vector<2x128xf32>
    tpu.vector_store %arg7[%c0_19, %c0_20], %30 {strides = array<i32>} : memref<2x128xf32, #tpu.memory_space<vmem>>, vector<2x128xf32>,
    return
  }
  func.func @transform_0(%arg0: i32) -> i32 {
    %c0_i32 = arith.constant 0 : i32
    %c0_i32_0 = arith.constant 0 : i32
    return %c0_i32 : i32
  }
  func.func @transform_1(%arg0: i32) -> (i32, i32, i32) {
    %c0_i32 = arith.constant 0 : i32
    %c0_i32_0 = arith.constant 0 : i32
    %c0_i32_1 = arith.constant 0 : i32
    return %arg0, %c0_i32, %c0_i32_0 : i32, i32, i32
  }
  func.func @transform_2(%arg0: i32) -> (i32, i32) {
    %c0_i32 = arith.constant 0 : i32
    %c0_i32_0 = arith.constant 0 : i32
    %c0_i32_1 = arith.constant 0 : i32
    return %c0_i32, %c0_i32_0 : i32, i32
  }
  func.func @transform_3(%arg0: i32) -> (i32, i32) {
    %c0_i32 = arith.constant 0 : i32
    %c0_i32_0 = arith.constant 0 : i32
    %c0_i32_1 = arith.constant 0 : i32
    return %c0_i32, %c0_i32_0 : i32, i32
  }
  func.func @transform_4(%arg0: i32) -> (i32, i32) {
    %c0_i32 = arith.constant 0 : i32
    %c0_i32_0 = arith.constant 0 : i32
    %c0_i32_1 = arith.constant 0 : i32
    return %c0_i32, %c0_i32_0 : i32, i32
  }
  func.func @transform_5(%arg0: i32) -> (i32, i32) {
    %c0_i32 = arith.constant 0 : i32
    %c0_i32_0 = arith.constant 0 : i32
    %c0_i32_1 = arith.constant 0 : i32
    return %c0_i32, %c0_i32_0 : i32, i32
  }
  func.func @transform_6(%arg0: i32) -> (i32, i32) {
    %c0_i32 = arith.constant 0 : i32
    %c0_i32_0 = arith.constant 0 : i32
    return %arg0, %c0_i32 : i32, i32
  }
  func.func @transform_7(%arg0: i32) -> (i32, i32) {
    %c0_i32 = arith.constant 0 : i32
    %c0_i32_0 = arith.constant 0 : i32
    return %arg0, %c0_i32 : i32, i32
  }
}

</mosaic_0001>

<llo_original>
// kernel: tpu_custom_call.1
$region0: #{tpu_custom_call.1}
  #allocation0 [shape = 'u32[]', space=smem, size = 0x4, offset = 0x4, fixed_abs, tag = 'smem constant byte address 0x4 - core index']
  #allocation1 [shape = 'u32[144,128]{1,0:T(1,128)}', space=vmem, size = 0x12000, scoped, tag = 'internal scratch']
  #allocation2 [shape = 'f32[1]{0:T(128)S(6)}', space=smem, size = 0x200, scoped, tag = 'scoped memory for tpu_custom_call.1']
  %s0 = inlined_call_operand.<no memory space> [shape: f32[1], index: 0, kind: input, shape index: {}]
  %s1 = inlined_call_operand.vmem [shape: f32[2,17,32], index: 1, kind: input, shape index: {}]
  %s2 = inlined_call_operand.vmem [shape: f32[32,128], index: 2, kind: input, shape index: {}]
  %s3 = inlined_call_operand.vmem [shape: f32[1,128], index: 3, kind: input, shape index: {}]
  %s4 = inlined_call_operand.hbm [shape: f32[128,128], index: 4, kind: input, shape index: {}]
  %s5 = inlined_call_operand.vmem [shape: f32[1,128], index: 5, kind: input, shape index: {}]
  %s6 = inlined_call_operand.hbm [shape: f32[2,128], index: 6, kind: output, shape index: {0}]
  %s7 = inlined_call_operand.hbm [shape: f32[2,128], index: 7, kind: output, shape index: {1}]
  %8 = xla_tuple %s6, %s7
  %s9 = sld [smem:[#allocation0]]
  $region46: #{tpu_custom_call.1} parent=0
    _
  %s11 = ssub.s32 1, %s9
  %s12 = scalar_select 0, %s11, %s9
  %13 = sst [smem:[#allocation2]] %s0
  $region1: #{tpu_custom_call.1} parent=0
    #allocation3 [shape = 'u8[65536]{0}', space=vmem, size = 0x10000, scoped, tag = 'input window, operand 4, single buffered']
    #allocation4 [shape = 's32[1]{0}', space=sflag, size = 0x4, scoped, tag = 'scoped memory for tpu_custom_call.1']
    #allocation5 [shape = 's32[1]{0}', space=sflag, size = 0x4, scoped, tag = 'scoped memory for tpu_custom_call.1']
    #allocation6 [shape = 'u8[1024]{0}', space=vmem, size = 0x400, scoped, tag = 'output window, operand 0, single buffered']
    #allocation7 [shape = 'u8[1024]{0}', space=vmem, size = 0x400, scoped, tag = 'output window, operand 1, single buffered']
    #allocation8 [shape = 's32[1]{0}', space=sflag, size = 0x4, scoped, tag = 'scoped memory for tpu_custom_call.1']
    %14 = vsyncpa [#allocation4], 0
    %15 = vsyncpa [#allocation5], 0
    %16 = vsyncpa [#allocation8], 0
    // Predicated region
    $region2: #{tpu_custom_call.1} parent=1 // pred_check
      _
    $region3: #{tpu_custom_call.1} parent=1 // pred_check_branch
      %18 = sbr.rel (0) target = $region5
    $region4: #{tpu_custom_call.1} parent=1 // pred_region
      _
    $region5: #{tpu_custom_call.1} parent=1 // pred_fallthru
      _
    // Predicated region
    $region6: #{tpu_custom_call.1} parent=1 // pred_check
      _
    $region7: #{tpu_custom_call.1} parent=1 // pred_check_branch
      %20 = sbr.rel (0) target = $region9
    $region8: #{tpu_custom_call.1} parent=1 // pred_region
      _
    $region9: #{tpu_custom_call.1} parent=1 // pred_fallthru
      _
    // Predicated region
    $region10: #{tpu_custom_call.1} parent=1 // pred_check
      _
    $region11: #{tpu_custom_call.1} parent=1 // pred_check_branch
      %22 = sbr.rel (0) target = $region13
    $region12: #{tpu_custom_call.1} parent=1 // pred_region
      _
    $region13: #{tpu_custom_call.1} parent=1 // pred_fallthru
      _
    // Predicated region
    $region14: #{tpu_custom_call.1} parent=1 // pred_check
      _
    $region15: #{tpu_custom_call.1} parent=1 // pred_check_branch
      %24 = sbr.rel (0) target = $region17
    $region16: #{tpu_custom_call.1} parent=1 // pred_region
      _
    $region17: #{tpu_custom_call.1} parent=1 // pred_fallthru
      _
    // Predicated region
    $region18: #{tpu_custom_call.1} parent=1 // pred_check
      _
    $region19: #{tpu_custom_call.1} parent=1 // pred_check_branch
      %26 = sbr.rel (0) target = $region21
    $region20: #{tpu_custom_call.1} parent=1 // pred_region
      %s28 = ssub.s32 2048, 2048
      %29 = vsyncadd [#allocation4], %s28
      %s30 = sshll.u32 [#allocation3], 4
      %s31 = int_to_ptr.vmem [resolvable:$true] %s30
      %36 = dma.hbm_to_vmem [thread:$0]  %s4, 2048, %s31, [#allocation4], 128, 128, 8
    $region21: #{tpu_custom_call.1} parent=1 // pred_fallthru
      _
    // Predicated region
    $region22: #{tpu_custom_call.1} parent=1 // pred_check
      _
    $region23: #{tpu_custom_call.1} parent=1 // pred_check_branch
      %38 = sbr.rel (0) target = $region25
    $region24: #{tpu_custom_call.1} parent=1 // pred_region
      _
    $region25: #{tpu_custom_call.1} parent=1 // pred_fallthru
      _
    // Predicated region
    $region26: #{tpu_custom_call.1} parent=1 // pred_check
      _
    $region27: #{tpu_custom_call.1} parent=1 // pred_check_branch
      %40 = sbr.rel (0) target = $region29
    $region28: #{tpu_custom_call.1} parent=1 // pred_region
      %41 = dma.done [#allocation4], 2048
    $region29: #{tpu_custom_call.1} parent=1 // pred_fallthru
      _
    %v42 = vld [vmem:[%s1] sm:$0xff]
    %v43 = vld [vmem:[%s1 + $0x8] sm:$0xff]
    %v44 = vld [vmem:[%s1 + $0x10] sm:$0x1]
    %v45 = vld [vmem:[%s1 + $0x18] sm:$0xff]
    %v46 = vld [vmem:[%s1 + $0x20] sm:$0xff]
    %v47 = vld [vmem:[%s1 + $0x28] sm:$0x1]
    %v48 = vmax.f32 %v42, 1e-06
    %v49 = vmax.f32 %v43, 1e-06
    %v50 = vmax.f32 %v44, 1e-06
    %v51 = vmax.f32 %v45, 1e-06
    %v52 = vmax.f32 %v46, 1e-06
    %v53 = vmax.f32 %v47, 1e-06
    %s54 = sld [smem:[#allocation2]]
    %v55 = vlog2.pop %v48
    %v56 = vmul.f32 %v55, 0.6931472
    %v57 = vlog2.pop %v49
    %v58 = vmul.f32 %v57, 0.6931472
    %v59 = vlog2.pop %v50
    %v60 = vmul.f32 %v59, 0.6931472
    %v61 = vlog2.pop %v51
    %v62 = vmul.f32 %v61, 0.6931472
    %v63 = vlog2.pop %v52
    %v64 = vmul.f32 %v63, 0.6931472
    %v65 = vlog2.pop %v53
    %v66 = vmul.f32 %v65, 0.6931472
    %v67 = vstv %s54
    %v68 = vmul.f32 %v67, %v56
    %v69 = vmul.f32 %v67, %v58
    %v70 = vmul.f32 %v67, %v60
    %v71 = vmul.f32 %v67, %v62
    %v72 = vmul.f32 %v67, %v64
    %v73 = vmul.f32 %v67, %v66
    %v74 = vmul.f32 %v68, 1.442695
    %v75 = vpow.pop %v74
    %v76 = vmul.f32 %v69, 1.442695
    %v77 = vpow.pop %v76
    %v78 = vmul.f32 %v70, 1.442695
    %v79 = vpow.pop %v78
    %v80 = vmul.f32 %v71, 1.442695
    %v81 = vpow.pop %v80
    %v82 = vmul.f32 %v72, 1.442695
    %v83 = vpow.pop %v82
    %v84 = vmul.f32 %v73, 1.442695
    %v85 = vpow.pop %v84
    %v86 = vstv %s54
    %v87 = vrcp.pop %v86
    %s88 = vtos %v87
    %vm89 = vcmask 261120
    %v90 = vsel %vm89, %v75, 0.0
    %v91 = vsel %vm89, %v77, 0.0
    %v92 = vadd.f32 %v90, %v91
    %vm93 = vcmask 253952
    %v94 = vsel %vm93, %v79, 0.0
    %v95 = vadd.f32 %v92, %v94
    %v96 = vrot.slane %v95, 4
    %v97 = vadd.f32 %v95, %v96
    %v98 = vrot.slane %v97, 2
    %v99 = vadd.f32 %v97, %v98
    %v100 = vrot.slane %v99, 1
    %v101 = vadd.f32 %v99, %v100
    %v102 = vsel %vm89, %v81, 0.0
    %v103 = vsel %vm89, %v83, 0.0
    %v104 = vadd.f32 %v102, %v103
    %v105 = vsel %vm93, %v85, 0.0
    %v106 = vadd.f32 %v104, %v105
    %v107 = vrot.slane %v106, 4
    %v108 = vadd.f32 %v106, %v107
    %v109 = vrot.slane %v108, 2
    %v110 = vadd.f32 %v108, %v109
    %v111 = vrot.slane %v110, 1
    %v112 = vadd.f32 %v110, %v111
    %v113 = vsub.f32 %v101, %v75
    %v114 = vsub.f32 %v112, %v81
    %v115 = vmax.f32 %v113, 1e-30
    %v116 = vmax.f32 %v114, 1e-30
    %v117 = vlog2.pop %v115
    %v118 = vmul.f32 %v117, 0.6931472
    %v119 = vlog2.pop %v116
    %v120 = vmul.f32 %v119, 0.6931472
    %v121 = vsub.f32 %v118, 2.7725887
    %v122 = vsub.f32 %v120, 2.7725887
    %v123 = vstv %s88
    %v124 = vmul.f32 %v121, %v123
    %v125 = vmul.f32 %v122, %v123
    %v126 = vmul.f32 %v124, 1.442695
    %v127 = vpow.pop %v126
    %v128 = vmul.f32 %v125, 1.442695
    %v129 = vpow.pop %v128
    %v130 = vld [vmem:[%s2] sm:$0xff]
    %v131 = vld [vmem:[%s2 + $0x8] sm:$0xff]
    %v132 = vld [vmem:[%s2 + $0x10] sm:$0xff]
    %v133 = vld [vmem:[%s2 + $0x18] sm:$0xff]
    %v134 = vld [vmem:[%s3] sm:$0x1]
    %v136 = vlaneseq
    %v137 = vshrl.u32 %v136, 7
    %v138 = vsub.s32 0, %v137
    %v139 = vrot.slane %v134, %v138
    %v143 = vrot.slane %v129, 7
    %vm144 = vcmask 1041409
    %v145 = vsel %vm144, %v143, %v127
    %v146 = vsel %vm89, %v145, 0
    %148 = vmatprep.subr.mxu0 0.0
    %149 = vmatpush1.msra.mxu0 %v130
    %150 = vmatprep.subr.mxu0 0.0
    %151 = vmatpush1.msra.mxu0 %v131
    %152 = vmatprep.subr.mxu0 0.0
    %153 = vmatpush1.msra.mxu0 %v132
    %154 = vmatprep.subr.mxu0 0.0
    %155 = vmatpush1.msra.mxu0 %v133
    %156 = vmatprep.subr.mxu0 0.0
    %157 = vmatpush1.msra.mxu0 0.0
    %158 = vmatprep.subr.mxu0 0.0
    %159 = vmatpush1.msra.mxu0 0.0
    %160 = vmatprep.subr.mxu0 0.0
    %161 = vmatpush1.msra.mxu0 0.0
    %162 = vmatprep.subr.mxu0 0.0
    %163 = vmatpush1.msra.mxu0 0.0
    %164 = vmatprep.subr.mxu0 0.0
    %165 = vmatpush1.msra.mxu0 0.0
    %166 = vmatprep.subr.mxu0 0.0
    %167 = vmatpush1.msra.mxu0 0.0
    %168 = vmatprep.subr.mxu0 0.0
    %169 = vmatpush1.msra.mxu0 0.0
    %170 = vmatprep.subr.mxu0 0.0
    %171 = vmatpush1.msra.mxu0 0.0
    %172 = vmatprep.subr.mxu0 0.0
    %173 = vmatpush1.msra.mxu0 0.0
    %174 = vmatprep.subr.mxu0 0.0
    %175 = vmatpush1.msra.mxu0 0.0
    %176 = vmatprep.subr.mxu0 0.0
    %177 = vmatpush1.msra.mxu0 0.0
    %178 = vmatprep.subr.mxu0 0.0
    %179 = vmatpush1.msra.mxu0 0.0
    %180 = vmatprep.subr.mxu0 0.0
    %181 = vmatpush1.msra.mxu0 0.0
    %182 = vmatprep.subr.mxu0 0.0
    %183 = vmatpush1.msra.mxu0 0.0
    %184 = vmatprep.subr.mxu0 0.0
    %185 = vmatpush1.msra.mxu0 0.0
    %186 = vmatprep.subr.mxu0 0.0
    %187 = vmatpush1.msra.mxu0 0.0
    %188 = vmatprep.subr.mxu0 0.0
    %189 = vmatpush1.msra.mxu0 0.0
    %190 = vmatprep.subr.mxu0 0.0
    %191 = vmatpush1.msra.mxu0 0.0
    %192 = vmatprep.subr.mxu0 0.0
    %193 = vmatpush1.msra.mxu0 0.0
    %194 = vmatprep.subr.mxu0 0.0
    %195 = vmatpush1.msra.mxu0 0.0
    %196 = vmatprep.subr.mxu0 0.0
    %197 = vmatpush1.msra.mxu0 0.0
    %198 = vmatprep.subr.mxu0 0.0
    %199 = vmatpush1.msra.mxu0 0.0
    %200 = vmatprep.subr.mxu0 0.0
    %201 = vmatpush1.msra.mxu0 0.0
    %202 = vmatprep.subr.mxu0 0.0
    %203 = vmatpush1.msra.mxu0 0.0
    %204 = vmatprep.subr.mxu0 0.0
    %205 = vmatpush1.msra.mxu0 0.0
    %206 = vmatprep.subr.mxu0 0.0
    %207 = vmatpush1.msra.mxu0 0.0
    %208 = vmatprep.subr.mxu0 0.0
    %209 = vmatpush1.msra.mxu0 0.0
    %210 = vmatprep.subr.mxu0 0.0
    %211 = vmatpush1.msra.mxu0 0.0
    %212 = vmatprep.mubr.f32.mxu0 0.0
    %213 = vmatmul.mubr.f32.gmra.mrb[0].mxu0 %v146
    %v214 = vpop.f32.mrb[0].mxu0
    %v215 = vadd.f32 %v139, %v214
    %v216 = vpop.f32.mrb[0].mxu0
    %217 = vdwg.mxu0
    %v218 = vld [vmem:[#allocation3] sm:$0xff]
    %v219 = vld [vmem:[#allocation3 + $0x8] sm:$0xff]
    %v220 = vld [vmem:[#allocation3 + $0x10] sm:$0xff]
    %v221 = vld [vmem:[#allocation3 + $0x18] sm:$0xff]
    %v222 = vld [vmem:[#allocation3 + $0x20] sm:$0xff]
    %v223 = vld [vmem:[#allocation3 + $0x28] sm:$0xff]
    %v224 = vld [vmem:[#allocation3 + $0x30] sm:$0xff]
    %v225 = vld [vmem:[#allocation3 + $0x38] sm:$0xff]
    %v226 = vld [vmem:[#allocation3 + $0x40] sm:$0xff]
    %v227 = vld [vmem:[#allocation3 + $0x48] sm:$0xff]
    %v228 = vld [vmem:[#allocation3 + $0x50] sm:$0xff]
    %v229 = vld [vmem:[#allocation3 + $0x58] sm:$0xff]
    %v230 = vld [vmem:[#allocation3 + $0x60] sm:$0xff]
    %v231 = vld [vmem:[#allocation3 + $0x68] sm:$0xff]
    %v232 = vld [vmem:[#allocation3 + $0x70] sm:$0xff]
    %v233 = vld [vmem:[#allocation3 + $0x78] sm:$0xff]
    %v234 = vld [vmem:[%s5] sm:$0x1]
    %v236 = vlaneseq
    %v237 = vshrl.u32 %v236, 7
    %v238 = vsub.s32 0, %v237
    %v239 = vrot.slane %v234, %v238
    %241 = vmatprep.subr.mxu0 0.0
    %242 = vmatpush1.msra.mxu0 %v218
    %243 = vmatprep.subr.mxu0 0.0
    %244 = vmatpush1.msra.mxu0 %v219
    %245 = vmatprep.subr.mxu0 0.0
    %246 = vmatpush1.msra.mxu0 %v220
    %247 = vmatprep.subr.mxu0 0.0
    %248 = vmatpush1.msra.mxu0 %v221
    %249 = vmatprep.subr.mxu0 0.0
    %250 = vmatpush1.msra.mxu0 %v222
    %251 = vmatprep.subr.mxu0 0.0
    %252 = vmatpush1.msra.mxu0 %v223
    %253 = vmatprep.subr.mxu0 0.0
    %254 = vmatpush1.msra.mxu0 %v224
    %255 = vmatprep.subr.mxu0 0.0
    %256 = vmatpush1.msra.mxu0 %v225
    %257 = vmatprep.subr.mxu0 0.0
    %258 = vmatpush1.msra.mxu0 %v226
    %259 = vmatprep.subr.mxu0 0.0
    %260 = vmatpush1.msra.mxu0 %v227
    %261 = vmatprep.subr.mxu0 0.0
    %262 = vmatpush1.msra.mxu0 %v228
    %263 = vmatprep.subr.mxu0 0.0
    %264 = vmatpush1.msra.mxu0 %v229
    %265 = vmatprep.subr.mxu0 0.0
    %266 = vmatpush1.msra.mxu0 %v230
    %267 = vmatprep.subr.mxu0 0.0
    %268 = vmatpush1.msra.mxu0 %v231
    %269 = vmatprep.subr.mxu0 0.0
    %270 = vmatpush1.msra.mxu0 %v232
    %271 = vmatprep.subr.mxu0 0.0
    %272 = vmatpush1.msra.mxu0 %v233
    %273 = vmatprep.subr.mxu0 0.0
    %274 = vmatpush1.msra.mxu0 0.0
    %275 = vmatprep.subr.mxu0 0.0
    %276 = vmatpush1.msra.mxu0 0.0
    %277 = vmatprep.subr.mxu0 0.0
    %278 = vmatpush1.msra.mxu0 0.0
    %279 = vmatprep.subr.mxu0 0.0
    %280 = vmatpush1.msra.mxu0 0.0
    %281 = vmatprep.subr.mxu0 0.0
    %282 = vmatpush1.msra.mxu0 0.0
    %283 = vmatprep.subr.mxu0 0.0
    %284 = vmatpush1.msra.mxu0 0.0
    %285 = vmatprep.subr.mxu0 0.0
    %286 = vmatpush1.msra.mxu0 0.0
    %287 = vmatprep.subr.mxu0 0.0
    %288 = vmatpush1.msra.mxu0 0.0
    %289 = vmatprep.subr.mxu0 0.0
    %290 = vmatpush1.msra.mxu0 0.0
    %291 = vmatprep.subr.mxu0 0.0
    %292 = vmatpush1.msra.mxu0 0.0
    %293 = vmatprep.subr.mxu0 0.0
    %294 = vmatpush1.msra.mxu0 0.0
    %295 = vmatprep.subr.mxu0 0.0
    %296 = vmatpush1.msra.mxu0 0.0
    %297 = vmatprep.subr.mxu0 0.0
    %298 = vmatpush1.msra.mxu0 0.0
    %299 = vmatprep.subr.mxu0 0.0
    %300 = vmatpush1.msra.mxu0 0.0
    %301 = vmatprep.subr.mxu0 0.0
    %302 = vmatpush1.msra.mxu0 0.0
    %303 = vmatprep.subr.mxu0 0.0
    %304 = vmatpush1.msra.mxu0 0.0
    %305 = vmatprep.mubr.f32.mxu0 0.0
    %306 = vmatmul.mubr.f32.gmra.mrb[0].mxu0 %v215
    %v307 = vpop.f32.mrb[0].mxu0
    %v308 = vadd.f32 %v239, %v307
    %v309 = vpop.f32.mrb[0].mxu0
    %310 = vdwg.mxu0
    %311 = vst [vmem:[#allocation7] sm:$0x3] %v215
    %312 = vst [vmem:[#allocation6] sm:$0x3] %v308
    // Predicated region
    $region30: #{tpu_custom_call.1} parent=1 // pred_check
      _
    $region31: #{tpu_custom_call.1} parent=1 // pred_check_branch
      %314 = sbr.rel (0) target = $region33
    $region32: #{tpu_custom_call.1} parent=1 // pred_region
      %s316 = ssub.s32 32, 32
      %317 = vsyncadd [#allocation5], %s316
      %s319 = sshll.u32 [#allocation6], 4
      %s320 = int_to_ptr.vmem [resolvable:$true] %s319
      %322 = dma.vmem_to_hbm [thread:$0]  %s320, 32, %s6, [#allocation5]
    $region33: #{tpu_custom_call.1} parent=1 // pred_fallthru
      _
    // Predicated region
    $region34: #{tpu_custom_call.1} parent=1 // pred_check
      _
    $region35: #{tpu_custom_call.1} parent=1 // pred_check_branch
      %324 = sbr.rel (0) target = $region37
    $region36: #{tpu_custom_call.1} parent=1 // pred_region
      %s326 = ssub.s32 32, 32
      %327 = vsyncadd [#allocation8], %s326
      %s329 = sshll.u32 [#allocation7], 4
      %s330 = int_to_ptr.vmem [resolvable:$true] %s329
      %332 = dma.vmem_to_hbm [thread:$0]  %s330, 32, %s7, [#allocation8]
    $region37: #{tpu_custom_call.1} parent=1 // pred_fallthru
      _
    // Predicated region
    $region38: #{tpu_custom_call.1} parent=1 // pred_check
      _
    $region39: #{tpu_custom_call.1} parent=1 // pred_check_branch
      %334 = sbr.rel (0) target = $region41
    $region40: #{tpu_custom_call.1} parent=1 // pred_region
      %335 = dma.done [#allocation5], 32
    $region41: #{tpu_custom_call.1} parent=1 // pred_fallthru
      _
    // Predicated region
    $region42: #{tpu_custom_call.1} parent=1 // pred_check
      _
    $region43: #{tpu_custom_call.1} parent=1 // pred_check_branch
      %337 = sbr.rel (0) target = $region45
    $region44: #{tpu_custom_call.1} parent=1 // pred_region
      %338 = dma.done [#allocation8], 32
    $region45: #{tpu_custom_call.1} parent=1 // pred_fallthru
      _
    %339 = vsyncpa [#allocation4], 1
    %340 = vsyncpa [#allocation5], 1
    %341 = vsyncpa [#allocation8], 1

</llo_original>
